<compile_context>
chip_gen: v5e
topology: v5e:2x2
jax: 0.10.0
libtpu: 0.0.40
codegen_flags: <defaults>
</compile_context>

<pallas_src>
import math

import jax
import jax.numpy as jnp
from jax import lax
from jax.experimental import pallas as pl
from jax.experimental.pallas import tpu as pltpu


# Tables at or below this size take the whole-table-in-VMEM fast path.
_FAST_PATH_TABLE_BYTES = 8 * 1024 * 1024


def _round_up(n, m):
    return ((n + m - 1) // m) * m


def _compiler_params(vmem_needed_bytes):
    # Tight, derived VMEM limit (review: don't blanket-raise to 32 MiB).
    # Only override the scoped default when the derived need (plus headroom
    # for the compiler's own pipelining buffers) exceeds the most conservative
    # default (16 MiB on v5e); stay under v7x's 64 MiB physical VMEM.
    headroom = 2 * 1024 * 1024
    need = vmem_needed_bytes + headroom
    limit = None if need <= 16 * 1024 * 1024 else min(need, 60 * 1024 * 1024)
    return pltpu.CompilerParams(
        dimension_semantics=("parallel",),
        vmem_limit_bytes=limit,
    )


def _make_vmem_gather_kernel(rows_per_step):
    """Fast path: whole table resident in VMEM, gather rows with dynamic slices."""
    TR = rows_per_step

    def kernel(idx_ref, w_ref, o_ref):
        # idx_ref: SMEM (n_pad,) int32   (scalar prefetch)
        # w_ref:   VMEM (V, D)           whole table, resident across steps
        # o_ref:   VMEM (TR, D)          output block for this grid step
        base = pl.program_id(0) * TR
        # Static unroll (TR is capped at 128 in the wrapper): dynamic-row load
        # from the VMEM table, static-row store into the output block.
        for r in range(TR):
            j = idx_ref[base + r]
            o_ref[pl.ds(r, 1), :] = w_ref[pl.ds(j, 1), :]

    return kernel


def _make_hbm_gather_kernel(rows_per_step, issue_unroll=8):
    """Large-table path: per-row HBM DMAs straight into the output block."""
    TR = rows_per_step

    def kernel(idx_ref, w_hbm, o_ref, sem):
        # idx_ref: SMEM (n_pad,) int32   (scalar prefetch)
        # w_hbm:   HBM  (V, D)           raw ref (pl.ANY), manual row DMAs
        # o_ref:   VMEM (TR, D)          output block; rows DMA'd straight in
        # sem:     single DMA semaphore shared by all TR row copies
        base = pl.program_id(0) * TR

        def issue(r, carry):
            row = idx_ref[base + r]
            pltpu.make_async_copy(
                w_hbm.at[pl.ds(row, 1), :],
                o_ref.at[pl.ds(r, 1), :],
                sem,
            ).start()
            return carry

        # Keep all TR row copies in flight; moderate unroll bounds code size
        # while keeping the DMA-issue stream visible to the scheduler.
        lax.fori_loop(0, TR, issue, 0, unroll=issue_unroll)

        # One aggregated wait: every row copy signals `sem` with its byte
        # count; a (TR, D)-sized descriptor consumes the total.  Only the
        # destination byte count + semaphore matter for .wait(), so the
        # descriptor reuses o_ref on both sides.
        pltpu.make_async_copy(o_ref, o_ref, sem).wait()

    return kernel


def simple_embedding_forward(x, weight, *, force_hbm_path=False):
    """Same semantics as torch nn.Embedding forward: weight[x].

    x: integer array of any shape; weight: (V, D).  Returns x.shape + (D,).
    """
    lead_shape = x.shape
    V, D = weight.shape
    N = math.prod(lead_shape) if lead_shape else 1
    itemsize = jnp.dtype(weight.dtype).itemsize
    table_bytes = V * D * itemsize

    use_fast = (table_bytes <= _FAST_PATH_TABLE_BYTES) and not force_hbm_path

    if use_fast:
        rows_per_step = min(128, _round_up(N, 8))
    else:
        rows_per_step = 256 if D < 2048 else 128
        rows_per_step = min(rows_per_step, _round_up(N, 8))
    TR = rows_per_step
    n_pad = _round_up(N, TR)
    grid = (n_pad // TR,)

    # Clamp (jnp gather semantics; also guards the row access against OOB).
    # NOTE: torch nn.Embedding would raise on out-of-range indices.
    idx = jnp.clip(x.reshape(-1).astype(jnp.int32), 0, V - 1)
    if n_pad != N:
        idx = jnp.concatenate([idx, jnp.zeros((n_pad - N,), jnp.int32)])

    out_block_bytes = TR * D * itemsize

    if use_fast:
        kernel = _make_vmem_gather_kernel(TR)
        vmem_needed = 2 * table_bytes + 2 * out_block_bytes
        out_flat = pl.pallas_call(
            kernel,
            out_shape=jax.ShapeDtypeStruct((n_pad, D), weight.dtype),
            grid_spec=pltpu.PrefetchScalarGridSpec(
                num_scalar_prefetch=1,
                grid=grid,
                in_specs=[pl.BlockSpec((V, D), lambda i, idx_ref: (0, 0))],
                out_specs=pl.BlockSpec((TR, D), lambda i, idx_ref: (i, 0)),
            ),
            compiler_params=_compiler_params(vmem_needed),
        )(idx, weight)
    else:
        kernel = _make_hbm_gather_kernel(TR)
        vmem_needed = 2 * out_block_bytes
        out_flat = pl.pallas_call(
            kernel,
            out_shape=jax.ShapeDtypeStruct((n_pad, D), weight.dtype),
            grid_spec=pltpu.PrefetchScalarGridSpec(
                num_scalar_prefetch=1,
                grid=grid,
                in_specs=[pl.BlockSpec(memory_space=pl.ANY)],  # table stays in HBM
                out_specs=pl.BlockSpec((TR, D), lambda i, idx_ref: (i, 0)),
                scratch_shapes=[pltpu.SemaphoreType.DMA(())],
            ),
            compiler_params=_compiler_params(vmem_needed),
        )(idx, weight)

    return out_flat[:N].reshape(*lead_shape, D)


if __name__ == "__main__":
    # Module config (small, deterministic)
    num_embeddings = 32
    embedding_dim = 32
    B, S = 2, 8

    key = jax.random.PRNGKey(0)
    k_w, k_x = jax.random.split(key)

    # nn.Embedding default init: weight ~ N(0, 1)
    weight = jax.random.normal(k_w, (num_embeddings, embedding_dim),
                               dtype=jnp.float32)
    x = jax.random.randint(k_x, (B, S), 0, num_embeddings, dtype=jnp.int32)

    ref = weight[x]  # plain-JAX reference (same semantics as torch embedding)

    # 1) Fast path (whole table in VMEM) — the regime of this module's config.
    out = jax.block_until_ready(simple_embedding_forward(x, weight))
    assert out.shape == (B, S, embedding_dim)
    assert jnp.allclose(out, ref), "fast path mismatch vs reference gather"

    # 2) Large-table HBM-gather path, forced on the same inputs to validate it.
    out_hbm = jax.block_until_ready(
        simple_embedding_forward(x, weight, force_hbm_path=True))
    assert jnp.allclose(out_hbm, ref), "HBM path mismatch vs reference gather"

    # 3) Fast path with multiple grid steps + padding (N not a multiple of TR).
    x2 = jax.random.randint(k_x, (4, 50), 0, num_embeddings, dtype=jnp.int32)
    out2 = jax.block_until_ready(simple_embedding_forward(x2, weight))
    assert jnp.allclose(out2, weight[x2]), "multi-step fast path mismatch"

    print("KERNEL_OK")
</pallas_src>

<mosaic_0001>
module attributes {stable_mosaic.version = 11 : i64} {
  func.func @kernel(%arg0: i32, %arg1: memref<16xi32, #tpu.memory_space<smem>>, %arg2: memref<32x32xf32, #tpu.memory_space<vmem>>, %arg3: memref<16x32xf32, #tpu.memory_space<vmem>>) attributes {dimension_semantics = [#tpu.dimension_semantics<parallel>], iteration_bounds = array<i64: 1>, scalar_prefetch = 1 : i64, scratch_operands = 0 : i64, tpu.core_type = #tpu.core_type<tc>, window_params = [{pipeline_mode = #tpu.pipeline_mode<synchronous>, transform_indices = @transform_0, window_bounds = array<i64: 32, 32>}, {transform_indices = @transform_1, window_bounds = array<i64: 16, 32>}]} {
    %c16_i32 = arith.constant 16 : i32
    %0 = arith.muli %arg0, %c16_i32 : i32
    %c0_i32 = arith.constant 0 : i32
    %1 = arith.addi %0, %c0_i32 : i32
    %2 = arith.index_cast %1 : i32 to index
    %3 = memref.load %arg1[%2] : memref<16xi32, #tpu.memory_space<smem>>
    %4 = arith.index_cast %3 : i32 to index
    %c0 = arith.constant 0 : index
    %5 = vector.load %arg2[%4, %c0] : memref<32x32xf32, #tpu.memory_space<vmem>>, vector<1x32xf32>
    %c0_0 = arith.constant 0 : index
    %c0_1 = arith.constant 0 : index
    %6 = vector.load %arg3[%c0_0, %c0_1] : memref<16x32xf32, #tpu.memory_space<vmem>>, vector<1x32xf32>
    tpu.vector_store %arg3[%c0_0, %c0_1], %5 {strides = array<i32>} : memref<16x32xf32, #tpu.memory_space<vmem>>, vector<1x32xf32>,
    %c1_i32 = arith.constant 1 : i32
    %7 = arith.addi %0, %c1_i32 : i32
    %8 = arith.index_cast %7 : i32 to index
    %9 = memref.load %arg1[%8] : memref<16xi32, #tpu.memory_space<smem>>
    %10 = arith.index_cast %9 : i32 to index
    %c0_2 = arith.constant 0 : index
    %11 = vector.load %arg2[%10, %c0_2] : memref<32x32xf32, #tpu.memory_space<vmem>>, vector<1x32xf32>
    %c1 = arith.constant 1 : index
    %c0_3 = arith.constant 0 : index
    %12 = vector.load %arg3[%c1, %c0_3] : memref<16x32xf32, #tpu.memory_space<vmem>>, vector<1x32xf32>
    tpu.vector_store %arg3[%c1, %c0_3], %11 {strides = array<i32>} : memref<16x32xf32, #tpu.memory_space<vmem>>, vector<1x32xf32>,
    %c2_i32 = arith.constant 2 : i32
    %13 = arith.addi %0, %c2_i32 : i32
    %14 = arith.index_cast %13 : i32 to index
    %15 = memref.load %arg1[%14] : memref<16xi32, #tpu.memory_space<smem>>
    %16 = arith.index_cast %15 : i32 to index
    %c0_4 = arith.constant 0 : index
    %17 = vector.load %arg2[%16, %c0_4] : memref<32x32xf32, #tpu.memory_space<vmem>>, vector<1x32xf32>
    %c2 = arith.constant 2 : index
    %c0_5 = arith.constant 0 : index
    %18 = vector.load %arg3[%c2, %c0_5] : memref<16x32xf32, #tpu.memory_space<vmem>>, vector<1x32xf32>
    tpu.vector_store %arg3[%c2, %c0_5], %17 {strides = array<i32>} : memref<16x32xf32, #tpu.memory_space<vmem>>, vector<1x32xf32>,
    %c3_i32 = arith.constant 3 : i32
    %19 = arith.addi %0, %c3_i32 : i32
    %20 = arith.index_cast %19 : i32 to index
    %21 = memref.load %arg1[%20] : memref<16xi32, #tpu.memory_space<smem>>
    %22 = arith.index_cast %21 : i32 to index
    %c0_6 = arith.constant 0 : index
    %23 = vector.load %arg2[%22, %c0_6] : memref<32x32xf32, #tpu.memory_space<vmem>>, vector<1x32xf32>
    %c3 = arith.constant 3 : index
    %c0_7 = arith.constant 0 : index
    %24 = vector.load %arg3[%c3, %c0_7] : memref<16x32xf32, #tpu.memory_space<vmem>>, vector<1x32xf32>
    tpu.vector_store %arg3[%c3, %c0_7], %23 {strides = array<i32>} : memref<16x32xf32, #tpu.memory_space<vmem>>, vector<1x32xf32>,
    %c4_i32 = arith.constant 4 : i32
    %25 = arith.addi %0, %c4_i32 : i32
    %26 = arith.index_cast %25 : i32 to index
    %27 = memref.load %arg1[%26] : memref<16xi32, #tpu.memory_space<smem>>
    %28 = arith.index_cast %27 : i32 to index
    %c0_8 = arith.constant 0 : index
    %29 = vector.load %arg2[%28, %c0_8] : memref<32x32xf32, #tpu.memory_space<vmem>>, vector<1x32xf32>
    %c4 = arith.constant 4 : index
    %c0_9 = arith.constant 0 : index
    %30 = vector.load %arg3[%c4, %c0_9] : memref<16x32xf32, #tpu.memory_space<vmem>>, vector<1x32xf32>
    tpu.vector_store %arg3[%c4, %c0_9], %29 {strides = array<i32>} : memref<16x32xf32, #tpu.memory_space<vmem>>, vector<1x32xf32>,
    %c5_i32 = arith.constant 5 : i32
    %31 = arith.addi %0, %c5_i32 : i32
    %32 = arith.index_cast %31 : i32 to index
    %33 = memref.load %arg1[%32] : memref<16xi32, #tpu.memory_space<smem>>
    %34 = arith.index_cast %33 : i32 to index
    %c0_10 = arith.constant 0 : index
    %35 = vector.load %arg2[%34, %c0_10] : memref<32x32xf32, #tpu.memory_space<vmem>>, vector<1x32xf32>
    %c5 = arith.constant 5 : index
    %c0_11 = arith.constant 0 : index
    %36 = vector.load %arg3[%c5, %c0_11] : memref<16x32xf32, #tpu.memory_space<vmem>>, vector<1x32xf32>
    tpu.vector_store %arg3[%c5, %c0_11], %35 {strides = array<i32>} : memref<16x32xf32, #tpu.memory_space<vmem>>, vector<1x32xf32>,
    %c6_i32 = arith.constant 6 : i32
    %37 = arith.addi %0, %c6_i32 : i32
    %38 = arith.index_cast %37 : i32 to index
    %39 = memref.load %arg1[%38] : memref<16xi32, #tpu.memory_space<smem>>
    %40 = arith.index_cast %39 : i32 to index
    %c0_12 = arith.constant 0 : index
    %41 = vector.load %arg2[%40, %c0_12] : memref<32x32xf32, #tpu.memory_space<vmem>>, vector<1x32xf32>
    %c6 = arith.constant 6 : index
    %c0_13 = arith.constant 0 : index
    %42 = vector.load %arg3[%c6, %c0_13] : memref<16x32xf32, #tpu.memory_space<vmem>>, vector<1x32xf32>
    tpu.vector_store %arg3[%c6, %c0_13], %41 {strides = array<i32>} : memref<16x32xf32, #tpu.memory_space<vmem>>, vector<1x32xf32>,
    %c7_i32 = arith.constant 7 : i32
    %43 = arith.addi %0, %c7_i32 : i32
    %44 = arith.index_cast %43 : i32 to index
    %45 = memref.load %arg1[%44] : memref<16xi32, #tpu.memory_space<smem>>
    %46 = arith.index_cast %45 : i32 to index
    %c0_14 = arith.constant 0 : index
    %47 = vector.load %arg2[%46, %c0_14] : memref<32x32xf32, #tpu.memory_space<vmem>>, vector<1x32xf32>
    %c7 = arith.constant 7 : index
    %c0_15 = arith.constant 0 : index
    %48 = vector.load %arg3[%c7, %c0_15] : memref<16x32xf32, #tpu.memory_space<vmem>>, vector<1x32xf32>
    tpu.vector_store %arg3[%c7, %c0_15], %47 {strides = array<i32>} : memref<16x32xf32, #tpu.memory_space<vmem>>, vector<1x32xf32>,
    %c8_i32 = arith.constant 8 : i32
    %49 = arith.addi %0, %c8_i32 : i32
    %50 = arith.index_cast %49 : i32 to index
    %51 = memref.load %arg1[%50] : memref<16xi32, #tpu.memory_space<smem>>
    %52 = arith.index_cast %51 : i32 to index
    %c0_16 = arith.constant 0 : index
    %53 = vector.load %arg2[%52, %c0_16] : memref<32x32xf32, #tpu.memory_space<vmem>>, vector<1x32xf32>
    %c8 = arith.constant 8 : index
    %c0_17 = arith.constant 0 : index
    %54 = vector.load %arg3[%c8, %c0_17] : memref<16x32xf32, #tpu.memory_space<vmem>>, vector<1x32xf32>
    tpu.vector_store %arg3[%c8, %c0_17], %53 {strides = array<i32>} : memref<16x32xf32, #tpu.memory_space<vmem>>, vector<1x32xf32>,
    %c9_i32 = arith.constant 9 : i32
    %55 = arith.addi %0, %c9_i32 : i32
    %56 = arith.index_cast %55 : i32 to index
    %57 = memref.load %arg1[%56] : memref<16xi32, #tpu.memory_space<smem>>
    %58 = arith.index_cast %57 : i32 to index
    %c0_18 = arith.constant 0 : index
    %59 = vector.load %arg2[%58, %c0_18] : memref<32x32xf32, #tpu.memory_space<vmem>>, vector<1x32xf32>
    %c9 = arith.constant 9 : index
    %c0_19 = arith.constant 0 : index
    %60 = vector.load %arg3[%c9, %c0_19] : memref<16x32xf32, #tpu.memory_space<vmem>>, vector<1x32xf32>
    tpu.vector_store %arg3[%c9, %c0_19], %59 {strides = array<i32>} : memref<16x32xf32, #tpu.memory_space<vmem>>, vector<1x32xf32>,
    %c10_i32 = arith.constant 10 : i32
    %61 = arith.addi %0, %c10_i32 : i32
    %62 = arith.index_cast %61 : i32 to index
    %63 = memref.load %arg1[%62] : memref<16xi32, #tpu.memory_space<smem>>
    %64 = arith.index_cast %63 : i32 to index
    %c0_20 = arith.constant 0 : index
    %65 = vector.load %arg2[%64, %c0_20] : memref<32x32xf32, #tpu.memory_space<vmem>>, vector<1x32xf32>
    %c10 = arith.constant 10 : index
    %c0_21 = arith.constant 0 : index
    %66 = vector.load %arg3[%c10, %c0_21] : memref<16x32xf32, #tpu.memory_space<vmem>>, vector<1x32xf32>
    tpu.vector_store %arg3[%c10, %c0_21], %65 {strides = array<i32>} : memref<16x32xf32, #tpu.memory_space<vmem>>, vector<1x32xf32>,
    %c11_i32 = arith.constant 11 : i32
    %67 = arith.addi %0, %c11_i32 : i32
    %68 = arith.index_cast %67 : i32 to index
    %69 = memref.load %arg1[%68] : memref<16xi32, #tpu.memory_space<smem>>
    %70 = arith.index_cast %69 : i32 to index
    %c0_22 = arith.constant 0 : index
    %71 = vector.load %arg2[%70, %c0_22] : memref<32x32xf32, #tpu.memory_space<vmem>>, vector<1x32xf32>
    %c11 = arith.constant 11 : index
    %c0_23 = arith.constant 0 : index
    %72 = vector.load %arg3[%c11, %c0_23] : memref<16x32xf32, #tpu.memory_space<vmem>>, vector<1x32xf32>
    tpu.vector_store %arg3[%c11, %c0_23], %71 {strides = array<i32>} : memref<16x32xf32, #tpu.memory_space<vmem>>, vector<1x32xf32>,
    %c12_i32 = arith.constant 12 : i32
    %73 = arith.addi %0, %c12_i32 : i32
    %74 = arith.index_cast %73 : i32 to index
    %75 = memref.load %arg1[%74] : memref<16xi32, #tpu.memory_space<smem>>
    %76 = arith.index_cast %75 : i32 to index
    %c0_24 = arith.constant 0 : index
    %77 = vector.load %arg2[%76, %c0_24] : memref<32x32xf32, #tpu.memory_space<vmem>>, vector<1x32xf32>
    %c12 = arith.constant 12 : index
    %c0_25 = arith.constant 0 : index
    %78 = vector.load %arg3[%c12, %c0_25] : memref<16x32xf32, #tpu.memory_space<vmem>>, vector<1x32xf32>
    tpu.vector_store %arg3[%c12, %c0_25], %77 {strides = array<i32>} : memref<16x32xf32, #tpu.memory_space<vmem>>, vector<1x32xf32>,
    %c13_i32 = arith.constant 13 : i32
    %79 = arith.addi %0, %c13_i32 : i32
    %80 = arith.index_cast %79 : i32 to index
    %81 = memref.load %arg1[%80] : memref<16xi32, #tpu.memory_space<smem>>
    %82 = arith.index_cast %81 : i32 to index
    %c0_26 = arith.constant 0 : index
    %83 = vector.load %arg2[%82, %c0_26] : memref<32x32xf32, #tpu.memory_space<vmem>>, vector<1x32xf32>
    %c13 = arith.constant 13 : index
    %c0_27 = arith.constant 0 : index
    %84 = vector.load %arg3[%c13, %c0_27] : memref<16x32xf32, #tpu.memory_space<vmem>>, vector<1x32xf32>
    tpu.vector_store %arg3[%c13, %c0_27], %83 {strides = array<i32>} : memref<16x32xf32, #tpu.memory_space<vmem>>, vector<1x32xf32>,
    %c14_i32 = arith.constant 14 : i32
    %85 = arith.addi %0, %c14_i32 : i32
    %86 = arith.index_cast %85 : i32 to index
    %87 = memref.load %arg1[%86] : memref<16xi32, #tpu.memory_space<smem>>
    %88 = arith.index_cast %87 : i32 to index
    %c0_28 = arith.constant 0 : index
    %89 = vector.load %arg2[%88, %c0_28] : memref<32x32xf32, #tpu.memory_space<vmem>>, vector<1x32xf32>
    %c14 = arith.constant 14 : index
    %c0_29 = arith.constant 0 : index
    %90 = vector.load %arg3[%c14, %c0_29] : memref<16x32xf32, #tpu.memory_space<vmem>>, vector<1x32xf32>
    tpu.vector_store %arg3[%c14, %c0_29], %89 {strides = array<i32>} : memref<16x32xf32, #tpu.memory_space<vmem>>, vector<1x32xf32>,
    %c15_i32 = arith.constant 15 : i32
    %91 = arith.addi %0, %c15_i32 : i32
    %92 = arith.index_cast %91 : i32 to index
    %93 = memref.load %arg1[%92] : memref<16xi32, #tpu.memory_space<smem>>
    %94 = arith.index_cast %93 : i32 to index
    %c0_30 = arith.constant 0 : index
    %95 = vector.load %arg2[%94, %c0_30] : memref<32x32xf32, #tpu.memory_space<vmem>>, vector<1x32xf32>
    %c15 = arith.constant 15 : index
    %c0_31 = arith.constant 0 : index
    %96 = vector.load %arg3[%c15, %c0_31] : memref<16x32xf32, #tpu.memory_space<vmem>>, vector<1x32xf32>
    tpu.vector_store %arg3[%c15, %c0_31], %95 {strides = array<i32>} : memref<16x32xf32, #tpu.memory_space<vmem>>, vector<1x32xf32>,
    return
  }
  func.func @transform_0(%arg0: i32, %arg1: memref<16xi32, #tpu.memory_space<smem>>) -> (i32, i32) {
    %c0_i32 = arith.constant 0 : i32
    %c0_i32_0 = arith.constant 0 : i32
    %c0_i32_1 = arith.constant 0 : i32
    return %c0_i32, %c0_i32_0 : i32, i32
  }
  func.func @transform_1(%arg0: i32, %arg1: memref<16xi32, #tpu.memory_space<smem>>) -> (i32, i32) {
    %c0_i32 = arith.constant 0 : i32
    %c0_i32_0 = arith.constant 0 : i32
    return %arg0, %c0_i32 : i32, i32
  }
}

</mosaic_0001>

<llo_original>
// kernel: tpu_custom_call.1
$region0: #{tpu_custom_call.1}
  #allocation0 [shape = 'u32[]', space=smem, size = 0x4, offset = 0x4, fixed_abs, tag = 'smem constant byte address 0x4 - core index']
  #allocation1 [shape = 'u32[72,128]{1,0:T(1,128)}', space=vmem, size = 0x9000, scoped, tag = 'internal scratch']
  #allocation2 [shape = 's32[1]{0}', space=sflag, size = 0x4, scoped, tag = 'scoped memory for tpu_custom_call.1']
  #allocation3 [shape = 'u8[512]{0}', space=smem, size = 0x200, scoped, tag = 'prefetched SMEM operand 0']
  %s0 = inlined_call_operand.hbm [shape: s32[16], index: 0, kind: input, shape index: {}]
  %s1 = inlined_call_operand.hbm [shape: f32[32,32], index: 1, kind: input, shape index: {}]
  %s2 = inlined_call_operand.hbm [shape: f32[16,32], index: 2, kind: output, shape index: {}]
  %s3 = sld [smem:[#allocation0]]
  $region18: #{tpu_custom_call.1} parent=0
    _
  %s5 = ssub.s32 1, %s3
  %s6 = scalar_select 0, %s5, %s3
  %s8 = sshll.u32 %s0, 4
  %s9 = int_to_ptr.hbm [resolvable:$true] %s8
  %11 = dma.hbm_to_smem %s9, 16, [#allocation3], [#allocation2]
  %13 = dma.done [#allocation2], 16
  %14 = sfence
  $region1: #{tpu_custom_call.1} parent=0
    #allocation4 [shape = 'u8[16384]{0}', space=vmem, size = 0x4000, scoped, tag = 'input window, operand 1, single buffered']
    #allocation5 [shape = 's32[1]{0}', space=sflag, size = 0x4, scoped, tag = 'scoped memory for tpu_custom_call.1']
    #allocation6 [shape = 's32[1]{0}', space=sflag, size = 0x4, scoped, tag = 'scoped memory for tpu_custom_call.1']
    #allocation7 [shape = 'u8[8192]{0}', space=vmem, size = 0x2000, scoped, tag = 'output window, operand 0, single buffered']
    %15 = vsyncpa [#allocation5], 0
    %16 = vsyncpa [#allocation6], 0
    // Predicated region
    $region2: #{tpu_custom_call.1} parent=1 // pred_check
      _
    $region3: #{tpu_custom_call.1} parent=1 // pred_check_branch
      %18 = sbr.rel (0) target = $region5
    $region4: #{tpu_custom_call.1} parent=1 // pred_region
      %20 = vsyncadd [#allocation5], 0
      %s21 = sshll.u32 %s1, 4
      %s22 = int_to_ptr.hbm [resolvable:$true] %s21
      %s23 = sshll.u32 [#allocation4], 4
      %s24 = int_to_ptr.vmem [resolvable:$true] %s23
      %29 = dma.hbm_to_vmem [thread:$0]  %s22, 512, %s24, [#allocation5], 128, 128, 8
    $region5: #{tpu_custom_call.1} parent=1 // pred_fallthru
      _
    // Predicated region
    $region6: #{tpu_custom_call.1} parent=1 // pred_check
      _
    $region7: #{tpu_custom_call.1} parent=1 // pred_check_branch
      %31 = sbr.rel (0) target = $region9
    $region8: #{tpu_custom_call.1} parent=1 // pred_region
      %33 = dma.done [#allocation5], 512
    $region9: #{tpu_custom_call.1} parent=1 // pred_fallthru
      _
    %s34 = smul.u32 0, 16
    %s35 = sld [smem:[#allocation3 + %s34]]
    %s36 = scalar_lea.vmem [#allocation4], %s35
    %v37 = vld [vmem:[%s36] sm:$0x1]
    %vm38 = vcmask 253952
    %39 = vst.msk [vmem:[#allocation7] sm:$0x1] %vm38, %v37
    %s40 = sadd.s32 %s34, 1
    %s41 = sld [smem:[#allocation3 + %s40]]
    %s42 = scalar_lea.vmem [#allocation4], %s41
    %v43 = vld [vmem:[%s42] sm:$0x1]
    %44 = vst.msk [vmem:[#allocation7 + $0x1] sm:$0x1] %vm38, %v43
    %s45 = sadd.s32 %s34, 2
    %s46 = sld [smem:[#allocation3 + %s45]]
    %s47 = scalar_lea.vmem [#allocation4], %s46
    %v48 = vld [vmem:[%s47] sm:$0x1]
    %49 = vst.msk [vmem:[#allocation7 + $0x2] sm:$0x1] %vm38, %v48
    %s50 = sadd.s32 %s34, 3
    %s51 = sld [smem:[#allocation3 + %s50]]
    %s52 = scalar_lea.vmem [#allocation4], %s51
    %v53 = vld [vmem:[%s52] sm:$0x1]
    %54 = vst.msk [vmem:[#allocation7 + $0x3] sm:$0x1] %vm38, %v53
    %s55 = sadd.s32 %s34, 4
    %s56 = sld [smem:[#allocation3 + %s55]]
    %s57 = scalar_lea.vmem [#allocation4], %s56
    %v58 = vld [vmem:[%s57] sm:$0x1]
    %59 = vst.msk [vmem:[#allocation7 + $0x4] sm:$0x1] %vm38, %v58
    %s60 = sadd.s32 %s34, 5
    %s61 = sld [smem:[#allocation3 + %s60]]
    %s62 = scalar_lea.vmem [#allocation4], %s61
    %v63 = vld [vmem:[%s62] sm:$0x1]
    %64 = vst.msk [vmem:[#allocation7 + $0x5] sm:$0x1] %vm38, %v63
    %s65 = sadd.s32 %s34, 6
    %s66 = sld [smem:[#allocation3 + %s65]]
    %s67 = scalar_lea.vmem [#allocation4], %s66
    %v68 = vld [vmem:[%s67] sm:$0x1]
    %69 = vst.msk [vmem:[#allocation7 + $0x6] sm:$0x1] %vm38, %v68
    %s70 = sadd.s32 %s34, 7
    %s71 = sld [smem:[#allocation3 + %s70]]
    %s72 = scalar_lea.vmem [#allocation4], %s71
    %v73 = vld [vmem:[%s72] sm:$0x1]
    %74 = vst.msk [vmem:[#allocation7 + $0x7] sm:$0x1] %vm38, %v73
    %s75 = sadd.s32 %s34, 8
    %s76 = sld [smem:[#allocation3 + %s75]]
    %s77 = scalar_lea.vmem [#allocation4], %s76
    %v78 = vld [vmem:[%s77] sm:$0x1]
    %79 = vst.msk [vmem:[#allocation7 + $0x8] sm:$0x1] %vm38, %v78
    %s80 = sadd.s32 %s34, 9
    %s81 = sld [smem:[#allocation3 + %s80]]
    %s82 = scalar_lea.vmem [#allocation4], %s81
    %v83 = vld [vmem:[%s82] sm:$0x1]
    %84 = vst.msk [vmem:[#allocation7 + $0x9] sm:$0x1] %vm38, %v83
    %s85 = sadd.s32 %s34, 10
    %s86 = sld [smem:[#allocation3 + %s85]]
    %s87 = scalar_lea.vmem [#allocation4], %s86
    %v88 = vld [vmem:[%s87] sm:$0x1]
    %89 = vst.msk [vmem:[#allocation7 + $0xa] sm:$0x1] %vm38, %v88
    %s90 = sadd.s32 %s34, 11
    %s91 = sld [smem:[#allocation3 + %s90]]
    %s92 = scalar_lea.vmem [#allocation4], %s91
    %v93 = vld [vmem:[%s92] sm:$0x1]
    %94 = vst.msk [vmem:[#allocation7 + $0xb] sm:$0x1] %vm38, %v93
    %s95 = sadd.s32 %s34, 12
    %s96 = sld [smem:[#allocation3 + %s95]]
    %s97 = scalar_lea.vmem [#allocation4], %s96
    %v98 = vld [vmem:[%s97] sm:$0x1]
    %99 = vst.msk [vmem:[#allocation7 + $0xc] sm:$0x1] %vm38, %v98
    %s100 = sadd.s32 %s34, 13
    %s101 = sld [smem:[#allocation3 + %s100]]
    %s102 = scalar_lea.vmem [#allocation4], %s101
    %v103 = vld [vmem:[%s102] sm:$0x1]
    %104 = vst.msk [vmem:[#allocation7 + $0xd] sm:$0x1] %vm38, %v103
    %s105 = sadd.s32 %s34, 14
    %s106 = sld [smem:[#allocation3 + %s105]]
    %s107 = scalar_lea.vmem [#allocation4], %s106
    %v108 = vld [vmem:[%s107] sm:$0x1]
    %109 = vst.msk [vmem:[#allocation7 + $0xe] sm:$0x1] %vm38, %v108
    %s110 = sadd.s32 %s34, 15
    %s111 = sld [smem:[#allocation3 + %s110]]
    %s112 = scalar_lea.vmem [#allocation4], %s111
    %v113 = vld [vmem:[%s112] sm:$0x1]
    %114 = vst.msk [vmem:[#allocation7 + $0xf] sm:$0x1] %vm38, %v113
    // Predicated region
    $region10: #{tpu_custom_call.1} parent=1 // pred_check
      _
    $region11: #{tpu_custom_call.1} parent=1 // pred_check_branch
      %116 = sbr.rel (0) target = $region13
    $region12: #{tpu_custom_call.1} parent=1 // pred_region
      %118 = vsyncadd [#allocation6], 0
      %s119 = sshll.u32 [#allocation7], 4
      %s120 = int_to_ptr.vmem [resolvable:$true] %s119
      %s121 = sshll.u32 %s2, 4
      %s122 = int_to_ptr.hbm [resolvable:$true] %s121
      %127 = dma.vmem_to_hbm [thread:$0]  %s120, 256, %s122, [#allocation6], 128, 128, 8
    $region13: #{tpu_custom_call.1} parent=1 // pred_fallthru
      _
    // Predicated region
    $region14: #{tpu_custom_call.1} parent=1 // pred_check
      _
    $region15: #{tpu_custom_call.1} parent=1 // pred_check_branch
      %129 = sbr.rel (0) target = $region17
    $region16: #{tpu_custom_call.1} parent=1 // pred_region
      %131 = dma.done [#allocation6], 256
    $region17: #{tpu_custom_call.1} parent=1 // pred_fallthru
      _
    %132 = vsyncpa [#allocation5], 1
    %133 = vsyncpa [#allocation6], 1

</llo_original>
